<compile_context>
chip_gen: v5e
topology: v5e:2x2
jax: 0.10.0
libtpu: 0.0.40
codegen_flags: <defaults>
</compile_context>

<pallas_src>
import jax
import jax.numpy as jnp
from jax.experimental import pallas as pl
from jax.experimental.pallas import tpu as pltpu

IN_F = 4          # fc1 in_features
HID = 10          # fc1 out_features / fc2 in_features
OUT_F = 3         # fc2 out_features
LANES = 128       # slab lane width

# Parameter slab layout, (32, 128) float32, sublane-tile (8-row) aligned:
#   rows 0:4   cols 0:10 -> w1 (4, 10)
#   row  4     cols 0:10 -> b1 (1, 10)      (same row-0..7 tile as w1)
#   rows 8:18  cols 0:3  -> w2 (10, 3)      (starts on the row-8 tile boundary)
#   row  24    cols 0:3  -> b2 (1, 3)       (its own 8-aligned tile)
W1_ROW = 0
B1_ROW = IN_F                 # 4
W2_ROW = 8
B2_ROW = 24
PARAM_ROWS = 32


def iris_mlp_kernel(x_ref, p_ref, out_ref):
    # Static, tile-aligned slices of the packed parameter slab (zero-cost views).
    w1 = p_ref[W1_ROW:W1_ROW + IN_F, 0:HID]       # (4, 10)  f32
    b1 = p_ref[B1_ROW:B1_ROW + 1, 0:HID]          # (1, 10)  f32
    w2 = p_ref[W2_ROW:W2_ROW + HID, 0:OUT_F]      # (10, 3)  f32
    b2 = p_ref[B2_ROW:B2_ROW + 1, 0:OUT_F]        # (1, 3)   f32

    x = x_ref[...]                                                    # (B, 4) f32
    # fc1 + ReLU: f32 MXU matmul, f32 VPU bias + ReLU.
    h = jnp.dot(x, w1, preferred_element_type=jnp.float32)            # (B, 10)
    h = jnp.maximum(h + b1, 0.0)
    # fc2: f32 MXU matmul straight to the real (B, 3) logits.
    o = jnp.dot(h, w2, preferred_element_type=jnp.float32)            # (B, 3)
    out_ref[...] = (o + b2).astype(out_ref.dtype)                     # one masked vst


def pack_params(w1, b1, w2, b2):
    """Pack (w1, b1, w2, b2) into one tile-aligned (32, 128) f32 slab (done once)."""
    slab = jnp.zeros((PARAM_ROWS, LANES), jnp.float32)
    slab = slab.at[W1_ROW:W1_ROW + IN_F, 0:HID].set(w1)
    slab = slab.at[B1_ROW:B1_ROW + 1, 0:HID].set(b1.reshape(1, HID))
    slab = slab.at[W2_ROW:W2_ROW + HID, 0:OUT_F].set(w2)
    slab = slab.at[B2_ROW:B2_ROW + 1, 0:OUT_F].set(b2.reshape(1, OUT_F))
    return slab


def iris_nn_forward(x, param_slab):
    B = x.shape[0]
    flops = 2 * B * (IN_F * HID + HID * OUT_F)
    bytes_accessed = (x.size + param_slab.size + B * OUT_F) * 4

    # Single invocation, no grid: whole operands pinned in VMEM (~20 KiB),
    # 2 input DMAs + 1 output DMA.  Valid unchanged on v5e / v6e / v7x.
    return pl.pallas_call(
        iris_mlp_kernel,
        out_shape=jax.ShapeDtypeStruct((B, OUT_F), jnp.float32),
        in_specs=[
            pl.BlockSpec(memory_space=pltpu.MemorySpace.VMEM),  # x
            pl.BlockSpec(memory_space=pltpu.MemorySpace.VMEM),  # packed params
        ],
        out_specs=pl.BlockSpec(memory_space=pltpu.MemorySpace.VMEM),
        cost_estimate=pl.CostEstimate(
            flops=flops, transcendentals=0, bytes_accessed=bytes_accessed),
    )(x, param_slab)


def init_params(key):
    # Deterministic init mimicking PyTorch nn.Linear default:
    # U(-1/sqrt(fan_in), 1/sqrt(fan_in)) for both weight and bias.
    k1, k2, k3, k4 = jax.random.split(key, 4)
    bound1 = 1.0 / jnp.sqrt(IN_F)
    bound2 = 1.0 / jnp.sqrt(HID)
    # Stored as (in_features, out_features); equals torch weight.T
    w1 = jax.random.uniform(k1, (IN_F, HID), jnp.float32, -bound1, bound1)
    b1 = jax.random.uniform(k2, (1, HID), jnp.float32, -bound1, bound1)
    w2 = jax.random.uniform(k3, (HID, OUT_F), jnp.float32, -bound2, bound2)
    b2 = jax.random.uniform(k4, (1, OUT_F), jnp.float32, -bound2, bound2)
    return w1, b1, w2, b2


def reference_forward(x, w1, b1, w2, b2):
    # Pure-JAX reference matching the PyTorch module semantics.
    h = jnp.maximum(x @ w1 + b1, 0.0)
    return h @ w2 + b2


if __name__ == "__main__":
    key = jax.random.PRNGKey(0)
    kx, kp = jax.random.split(key)

    # Whole Iris-sized inference set in ONE call: 150 rows padded to 160
    # (multiple of 8 sublanes).  StandardScaler is data preprocessing outside
    # the module; inputs here are already synthetic standard-normal features.
    B = 160
    x = jax.random.normal(kx, (B, IN_F), dtype=jnp.float32)
    w1, b1, w2, b2 = init_params(kp)
    param_slab = pack_params(w1, b1, w2, b2)   # packed once, reused every call

    fwd = jax.jit(iris_nn_forward)
    out = jax.block_until_ready(fwd(x, param_slab))

    ref = reference_forward(x, w1, b1, w2, b2)
    assert out.shape == (B, OUT_F)
    # Both paths are f32 now; tolerance only covers MXU pass-count differences
    # between the Pallas matmul and XLA's reference matmul.
    assert jnp.allclose(out, ref, atol=1e-2, rtol=1e-2), "mismatch vs reference"

    print("KERNEL_OK")
</pallas_src>

<mosaic_0001>
module attributes {stable_mosaic.version = 11 : i64} {
  func.func @iris_mlp_kernel(%arg0: memref<160x4xf32, #tpu.memory_space<vmem>>, %arg1: memref<32x128xf32, #tpu.memory_space<vmem>>, %arg2: memref<160x3xf32, #tpu.memory_space<vmem>>) attributes {dimension_semantics = [], scalar_prefetch = 0 : i64, scratch_operands = 0 : i64, tpu.core_type = #tpu.core_type<tc>} {
    %c0 = arith.constant 0 : index
    %c0_0 = arith.constant 0 : index
    %0 = vector.load %arg1[%c0, %c0_0] : memref<32x128xf32, #tpu.memory_space<vmem>>, vector<4x10xf32>
    %c4 = arith.constant 4 : index
    %c0_1 = arith.constant 0 : index
    %1 = vector.load %arg1[%c4, %c0_1] : memref<32x128xf32, #tpu.memory_space<vmem>>, vector<1x10xf32>
    %c8 = arith.constant 8 : index
    %c0_2 = arith.constant 0 : index
    %2 = vector.load %arg1[%c8, %c0_2] : memref<32x128xf32, #tpu.memory_space<vmem>>, vector<10x3xf32>
    %c24 = arith.constant 24 : index
    %c0_3 = arith.constant 0 : index
    %3 = vector.load %arg1[%c24, %c0_3] : memref<32x128xf32, #tpu.memory_space<vmem>>, vector<1x3xf32>
    %c0_4 = arith.constant 0 : index
    %c0_5 = arith.constant 0 : index
    %4 = vector.load %arg0[%c0_4, %c0_5] : memref<160x4xf32, #tpu.memory_space<vmem>>, vector<160x4xf32>
    %cst = arith.constant dense<0.000000e+00> : vector<160x10xf32>
    %5 = tpu.matmul %4, %0, %cst {dimension_numbers = #tpu.dot_dimension_numbers<[1], [0], [0], [1], [0, 0, 1, 1], [], []>} : vector<160x4xf32>, vector<4x10xf32>, vector<160x10xf32> -> vector<160x10xf32>
    %6 = vector.broadcast %1 : vector<1x10xf32> to vector<160x10xf32>
    %7 = arith.addf %5, %6 : vector<160x10xf32>
    %cst_6 = arith.constant 0.000000e+00 : f32
    %8 = vector.broadcast %cst_6 : f32 to vector<160x10xf32>
    %9 = arith.maximumf %7, %8 : vector<160x10xf32>
    %cst_7 = arith.constant dense<0.000000e+00> : vector<160x3xf32>
    %10 = tpu.matmul %9, %2, %cst_7 {dimension_numbers = #tpu.dot_dimension_numbers<[1], [0], [0], [1], [0, 0, 1, 1], [], []>} : vector<160x10xf32>, vector<10x3xf32>, vector<160x3xf32> -> vector<160x3xf32>
    %11 = vector.broadcast %3 : vector<1x3xf32> to vector<160x3xf32>
    %12 = arith.addf %10, %11 : vector<160x3xf32>
    %c0_8 = arith.constant 0 : index
    %c0_9 = arith.constant 0 : index
    %13 = vector.load %arg2[%c0_8, %c0_9] : memref<160x3xf32, #tpu.memory_space<vmem>>, vector<160x3xf32>
    tpu.vector_store %arg2[%c0_8, %c0_9], %12 {strides = array<i32>} : memref<160x3xf32, #tpu.memory_space<vmem>>, vector<160x3xf32>,
    return
  }
}

</mosaic_0001>

<llo_original>
// kernel: iris_nn_forward.1
$region0: #{iris_nn_forward.1}
  #allocation0 [shape = 'u32[]', space=smem, size = 0x4, offset = 0x4, fixed_abs, tag = 'smem constant byte address 0x4 - core index']
  #allocation1 [shape = 'u32[72,128]{1,0:T(1,128)}', space=vmem, size = 0x9000, scoped, tag = 'internal scratch']
  %s0 = inlined_call_operand.vmem [shape: f32[160,4], index: 0, kind: input, shape index: {}]
  %s1 = inlined_call_operand.vmem [shape: f32[32,128], index: 1, kind: input, shape index: {}]
  %s2 = inlined_call_operand.vmem [shape: f32[160,3], index: 2, kind: output, shape index: {}]
  %s3 = sld [smem:[#allocation0]]
  $region18: #{iris_nn_forward.1} parent=0
    _
  %s5 = ssub.s32 1, %s3
  %s6 = scalar_select 0, %s5, %s3
  // Predicated region
  $region2: #{iris_nn_forward.1} parent=0 // pred_check
    _
  $region3: #{iris_nn_forward.1} parent=0 // pred_check_branch
    %8 = sbr.rel (0) target = $region5
  $region4: #{iris_nn_forward.1} parent=0 // pred_region
    _
  $region5: #{iris_nn_forward.1} parent=0 // pred_fallthru
    _
  // Predicated region
  $region6: #{iris_nn_forward.1} parent=0 // pred_check
    _
  $region7: #{iris_nn_forward.1} parent=0 // pred_check_branch
    %10 = sbr.rel (0) target = $region9
  $region8: #{iris_nn_forward.1} parent=0 // pred_region
    _
  $region9: #{iris_nn_forward.1} parent=0 // pred_fallthru
    _
  %v11 = vld [vmem:[%s1] sm:$0xf]
  %v12 = vld [vmem:[%s1 + $0x4] sm:$0x1]
  %v13 = vld [vmem:[%s1 + $0x8] sm:$0xff]
  %v14 = vld [vmem:[%s1 + $0x10] sm:$0x3]
  %v15 = vld [vmem:[%s1 + $0x18] sm:$0x1]
  %v16 = vld [vmem:[%s0] sm:$0xff]
  %v17 = vld [vmem:[%s0 + $0x8] sm:$0xff]
  %v18 = vld [vmem:[%s0 + $0x10] sm:$0xff]
  %v19 = vld [vmem:[%s0 + $0x18] sm:$0xff]
  %v20 = vld [vmem:[%s0 + $0x20] sm:$0xff]
  %v21 = vld [vmem:[%s0 + $0x28] sm:$0xff]
  %v22 = vld [vmem:[%s0 + $0x30] sm:$0xff]
  %v23 = vld [vmem:[%s0 + $0x38] sm:$0xff]
  %v24 = vld [vmem:[%s0 + $0x40] sm:$0xff]
  %v25 = vld [vmem:[%s0 + $0x48] sm:$0xff]
  %v26 = vld [vmem:[%s0 + $0x50] sm:$0xff]
  %v27 = vld [vmem:[%s0 + $0x58] sm:$0xff]
  %v28 = vld [vmem:[%s0 + $0x60] sm:$0xff]
  %v29 = vld [vmem:[%s0 + $0x68] sm:$0xff]
  %v30 = vld [vmem:[%s0 + $0x70] sm:$0xff]
  %v31 = vld [vmem:[%s0 + $0x78] sm:$0xff]
  %v32 = vld [vmem:[%s0 + $0x80] sm:$0xff]
  %v33 = vld [vmem:[%s0 + $0x88] sm:$0xff]
  %v34 = vld [vmem:[%s0 + $0x90] sm:$0xff]
  %v35 = vld [vmem:[%s0 + $0x98] sm:$0xff]
  %v36 = vperm.slane %v12, 0
  %vm37 = vcmask 31744
  %v39 = vsel %vm37, %v16, 0
  %v42 = vsel %vm37, %v17, 0
  %v45 = vsel %vm37, %v18, 0
  %v48 = vsel %vm37, %v19, 0
  %v51 = vsel %vm37, %v20, 0
  %v54 = vsel %vm37, %v21, 0
  %v57 = vsel %vm37, %v22, 0
  %v60 = vsel %vm37, %v23, 0
  %v63 = vsel %vm37, %v24, 0
  %v66 = vsel %vm37, %v25, 0
  %v69 = vsel %vm37, %v26, 0
  %v72 = vsel %vm37, %v27, 0
  %v75 = vsel %vm37, %v28, 0
  %v78 = vsel %vm37, %v29, 0
  %v81 = vsel %vm37, %v30, 0
  %v84 = vsel %vm37, %v31, 0
  %v87 = vsel %vm37, %v32, 0
  %v90 = vsel %vm37, %v33, 0
  %v93 = vsel %vm37, %v34, 0
  %v96 = vsel %vm37, %v35, 0
  %vm98 = vcmask 1043456
  %v100 = vsel %vm98, %v11, 0
  %102 = vmatpush.msra.mxu0 0.0
  %103 = vmatpush.msra.mxu0 0.0
  %104 = vmatpush.msra.mxu0 0.0
  %105 = vmatpush.msra.mxu0 0.0
  %106 = vmatpush.msra.mxu0 0.0
  %107 = vmatpush.msra.mxu0 0.0
  %108 = vmatpush.msra.mxu0 0.0
  %109 = vmatpush.msra.mxu0 0.0
  %110 = vmatpush.msra.mxu0 0.0
  %111 = vmatpush.msra.mxu0 0.0
  %112 = vmatpush.msra.mxu0 0.0
  %113 = vmatpush.msra.mxu0 0.0
  %114 = vmatpush.msra.mxu0 0.0
  %115 = vmatpush.msra.mxu0 0.0
  %116 = vmatpush.msra.mxu0 0.0
  %117 = vmatpush.msra.mxu0 %v100
  %118 = vmatmul.f32.gmra.mxu0 %v39
  %v119 = vpop.f32.mrf.mxu0
  %v120 = vadd.f32 %v36, %v119
  %121 = vmatmul.f32.gmra.mxu0 %v42
  %v122 = vpop.f32.mrf.mxu0
  %v123 = vadd.f32 %v36, %v122
  %124 = vmatmul.f32.gmra.mxu0 %v45
  %v125 = vpop.f32.mrf.mxu0
  %v126 = vadd.f32 %v36, %v125
  %127 = vmatmul.f32.gmra.mxu0 %v48
  %v128 = vpop.f32.mrf.mxu0
  %v129 = vadd.f32 %v36, %v128
  %130 = vmatmul.f32.gmra.mxu0 %v51
  %v131 = vpop.f32.mrf.mxu0
  %v132 = vadd.f32 %v36, %v131
  %133 = vmatmul.f32.gmra.mxu0 %v54
  %v134 = vpop.f32.mrf.mxu0
  %v135 = vadd.f32 %v36, %v134
  %136 = vmatmul.f32.gmra.mxu0 %v57
  %v137 = vpop.f32.mrf.mxu0
  %v138 = vadd.f32 %v36, %v137
  %139 = vmatmul.f32.gmra.mxu0 %v60
  %v140 = vpop.f32.mrf.mxu0
  %v141 = vadd.f32 %v36, %v140
  %142 = vmatmul.f32.gmra.mxu0 %v63
  %v143 = vpop.f32.mrf.mxu0
  %v144 = vadd.f32 %v36, %v143
  %145 = vmatmul.f32.gmra.mxu0 %v66
  %v146 = vpop.f32.mrf.mxu0
  %v147 = vadd.f32 %v36, %v146
  %148 = vmatmul.f32.gmra.mxu0 %v69
  %v149 = vpop.f32.mrf.mxu0
  %v150 = vadd.f32 %v36, %v149
  %151 = vmatmul.f32.gmra.mxu0 %v72
  %v152 = vpop.f32.mrf.mxu0
  %v153 = vadd.f32 %v36, %v152
  %154 = vmatmul.f32.gmra.mxu0 %v75
  %v155 = vpop.f32.mrf.mxu0
  %v156 = vadd.f32 %v36, %v155
  %157 = vmatmul.f32.gmra.mxu0 %v78
  %v158 = vpop.f32.mrf.mxu0
  %v159 = vadd.f32 %v36, %v158
  %160 = vmatmul.f32.gmra.mxu0 %v81
  %v161 = vpop.f32.mrf.mxu0
  %v162 = vadd.f32 %v36, %v161
  %163 = vmatmul.f32.gmra.mxu0 %v84
  %v164 = vpop.f32.mrf.mxu0
  %v165 = vadd.f32 %v36, %v164
  %166 = vmatmul.f32.gmra.mxu0 %v87
  %v167 = vpop.f32.mrf.mxu0
  %v168 = vadd.f32 %v36, %v167
  %169 = vmatmul.f32.gmra.mxu0 %v90
  %v170 = vpop.f32.mrf.mxu0
  %v171 = vadd.f32 %v36, %v170
  %172 = vmatmul.f32.gmra.mxu0 %v93
  %v173 = vpop.f32.mrf.mxu0
  %v174 = vadd.f32 %v36, %v173
  %175 = vmatmul.f32.gmra.mxu0 %v96
  %v176 = vpop.f32.mrf.mxu0
  %v177 = vadd.f32 %v36, %v176
  %178 = vdwg.mxu0
  %v179 = vmax.f32 %v120, 0.0
  %v180 = vmax.f32 %v123, 0.0
  %v181 = vmax.f32 %v126, 0.0
  %v182 = vmax.f32 %v129, 0.0
  %v183 = vmax.f32 %v132, 0.0
  %v184 = vmax.f32 %v135, 0.0
  %v185 = vmax.f32 %v138, 0.0
  %v186 = vmax.f32 %v141, 0.0
  %v187 = vmax.f32 %v144, 0.0
  %v188 = vmax.f32 %v147, 0.0
  %v189 = vmax.f32 %v150, 0.0
  %v190 = vmax.f32 %v153, 0.0
  %v191 = vmax.f32 %v156, 0.0
  %v192 = vmax.f32 %v159, 0.0
  %v193 = vmax.f32 %v162, 0.0
  %v194 = vmax.f32 %v165, 0.0
  %v195 = vmax.f32 %v168, 0.0
  %v196 = vmax.f32 %v171, 0.0
  %v197 = vmax.f32 %v174, 0.0
  %v198 = vmax.f32 %v177, 0.0
  %v199 = vperm.slane %v15, 0
  %vm200 = vcmask 80896
  %v202 = vsel %vm200, %v179, 0
  %v205 = vsel %vm200, %v180, 0
  %v208 = vsel %vm200, %v181, 0
  %v211 = vsel %vm200, %v182, 0
  %v214 = vsel %vm200, %v183, 0
  %v217 = vsel %vm200, %v184, 0
  %v220 = vsel %vm200, %v185, 0
  %v223 = vsel %vm200, %v186, 0
  %v226 = vsel %vm200, %v187, 0
  %v229 = vsel %vm200, %v188, 0
  %v232 = vsel %vm200, %v189, 0
  %v235 = vsel %vm200, %v190, 0
  %v238 = vsel %vm200, %v191, 0
  %v241 = vsel %vm200, %v192, 0
  %v244 = vsel %vm200, %v193, 0
  %v247 = vsel %vm200, %v194, 0
  %v250 = vsel %vm200, %v195, 0
  %v253 = vsel %vm200, %v196, 0
  %v256 = vsel %vm200, %v197, 0
  %v259 = vsel %vm200, %v198, 0
  %vm261 = vcmask 1041408
  %v263 = vsel %vm261, %v14, 0
  %265 = vmatpush.msra.mxu0 0.0
  %266 = vmatpush.msra.mxu0 0.0
  %267 = vmatpush.msra.mxu0 0.0
  %268 = vmatpush.msra.mxu0 0.0
  %269 = vmatpush.msra.mxu0 0.0
  %270 = vmatpush.msra.mxu0 0.0
  %271 = vmatpush.msra.mxu0 0.0
  %272 = vmatpush.msra.mxu0 0.0
  %273 = vmatpush.msra.mxu0 0.0
  %274 = vmatpush.msra.mxu0 0.0
  %275 = vmatpush.msra.mxu0 0.0
  %276 = vmatpush.msra.mxu0 0.0
  %277 = vmatpush.msra.mxu0 0.0
  %278 = vmatpush.msra.mxu0 0.0
  %279 = vmatpush.msra.mxu0 %v263
  %280 = vmatpush.msra.mxu0 %v13
  %281 = vmatmul.f32.gmra.mxu0 %v202
  %v282 = vpop.f32.mrf.mxu0
  %v283 = vadd.f32 %v199, %v282
  %284 = vmatmul.f32.gmra.mxu0 %v205
  %v285 = vpop.f32.mrf.mxu0
  %v286 = vadd.f32 %v199, %v285
  %287 = vmatmul.f32.gmra.mxu0 %v208
  %v288 = vpop.f32.mrf.mxu0
  %v289 = vadd.f32 %v199, %v288
  %290 = vmatmul.f32.gmra.mxu0 %v211
  %v291 = vpop.f32.mrf.mxu0
  %v292 = vadd.f32 %v199, %v291
  %293 = vmatmul.f32.gmra.mxu0 %v214
  %v294 = vpop.f32.mrf.mxu0
  %v295 = vadd.f32 %v199, %v294
  %296 = vmatmul.f32.gmra.mxu0 %v217
  %v297 = vpop.f32.mrf.mxu0
  %v298 = vadd.f32 %v199, %v297
  %299 = vmatmul.f32.gmra.mxu0 %v220
  %v300 = vpop.f32.mrf.mxu0
  %v301 = vadd.f32 %v199, %v300
  %302 = vmatmul.f32.gmra.mxu0 %v223
  %v303 = vpop.f32.mrf.mxu0
  %v304 = vadd.f32 %v199, %v303
  %305 = vmatmul.f32.gmra.mxu0 %v226
  %v306 = vpop.f32.mrf.mxu0
  %v307 = vadd.f32 %v199, %v306
  %308 = vmatmul.f32.gmra.mxu0 %v229
  %v309 = vpop.f32.mrf.mxu0
  %v310 = vadd.f32 %v199, %v309
  %311 = vmatmul.f32.gmra.mxu0 %v232
  %v312 = vpop.f32.mrf.mxu0
  %v313 = vadd.f32 %v199, %v312
  %314 = vmatmul.f32.gmra.mxu0 %v235
  %v315 = vpop.f32.mrf.mxu0
  %v316 = vadd.f32 %v199, %v315
  %317 = vmatmul.f32.gmra.mxu0 %v238
  %v318 = vpop.f32.mrf.mxu0
  %v319 = vadd.f32 %v199, %v318
  %320 = vmatmul.f32.gmra.mxu0 %v241
  %v321 = vpop.f32.mrf.mxu0
  %v322 = vadd.f32 %v199, %v321
  %323 = vmatmul.f32.gmra.mxu0 %v244
  %v324 = vpop.f32.mrf.mxu0
  %v325 = vadd.f32 %v199, %v324
  %326 = vmatmul.f32.gmra.mxu0 %v247
  %v327 = vpop.f32.mrf.mxu0
  %v328 = vadd.f32 %v199, %v327
  %329 = vmatmul.f32.gmra.mxu0 %v250
  %v330 = vpop.f32.mrf.mxu0
  %v331 = vadd.f32 %v199, %v330
  %332 = vmatmul.f32.gmra.mxu0 %v253
  %v333 = vpop.f32.mrf.mxu0
  %v334 = vadd.f32 %v199, %v333
  %335 = vmatmul.f32.gmra.mxu0 %v256
  %v336 = vpop.f32.mrf.mxu0
  %v337 = vadd.f32 %v199, %v336
  %338 = vmatmul.f32.gmra.mxu0 %v259
  %v339 = vpop.f32.mrf.mxu0
  %v340 = vadd.f32 %v199, %v339
  %341 = vdwg.mxu0
  %vm342 = vcmask 23552
  %343 = vst.msk [vmem:[%s2] sm:$0xff] %vm342, %v283
  %344 = vst.msk [vmem:[%s2 + $0x8] sm:$0xff] %vm342, %v286
  %345 = vst.msk [vmem:[%s2 + $0x10] sm:$0xff] %vm342, %v289
  %346 = vst.msk [vmem:[%s2 + $0x18] sm:$0xff] %vm342, %v292
  %347 = vst.msk [vmem:[%s2 + $0x20] sm:$0xff] %vm342, %v295
  %348 = vst.msk [vmem:[%s2 + $0x28] sm:$0xff] %vm342, %v298
  %349 = vst.msk [vmem:[%s2 + $0x30] sm:$0xff] %vm342, %v301
  %350 = vst.msk [vmem:[%s2 + $0x38] sm:$0xff] %vm342, %v304
  %351 = vst.msk [vmem:[%s2 + $0x40] sm:$0xff] %vm342, %v307
  %352 = vst.msk [vmem:[%s2 + $0x48] sm:$0xff] %vm342, %v310
  %353 = vst.msk [vmem:[%s2 + $0x50] sm:$0xff] %vm342, %v313
  %354 = vst.msk [vmem:[%s2 + $0x58] sm:$0xff] %vm342, %v316
  %355 = vst.msk [vmem:[%s2 + $0x60] sm:$0xff] %vm342, %v319
  %356 = vst.msk [vmem:[%s2 + $0x68] sm:$0xff] %vm342, %v322
  %357 = vst.msk [vmem:[%s2 + $0x70] sm:$0xff] %vm342, %v325
  %358 = vst.msk [vmem:[%s2 + $0x78] sm:$0xff] %vm342, %v328
  %359 = vst.msk [vmem:[%s2 + $0x80] sm:$0xff] %vm342, %v331
  %360 = vst.msk [vmem:[%s2 + $0x88] sm:$0xff] %vm342, %v334
  %361 = vst.msk [vmem:[%s2 + $0x90] sm:$0xff] %vm342, %v337
  %362 = vst.msk [vmem:[%s2 + $0x98] sm:$0xff] %vm342, %v340
  // Predicated region
  $region10: #{iris_nn_forward.1} parent=0 // pred_check
    _
  $region11: #{iris_nn_forward.1} parent=0 // pred_check_branch
    %364 = sbr.rel (0) target = $region13
  $region12: #{iris_nn_forward.1} parent=0 // pred_region
    _
  $region13: #{iris_nn_forward.1} parent=0 // pred_fallthru
    _
  // Predicated region
  $region14: #{iris_nn_forward.1} parent=0 // pred_check
    _
  $region15: #{iris_nn_forward.1} parent=0 // pred_check_branch
    %366 = sbr.rel (0) target = $region17
  $region16: #{iris_nn_forward.1} parent=0 // pred_region
    _
  $region17: #{iris_nn_forward.1} parent=0 // pred_fallthru
    _

</llo_original>
